<compile_context>
chip_gen: v7x
topology: tpu7x:2x2x1
jax: 0.10.0
libtpu: 0.0.40
codegen_flags: <defaults>
</compile_context>

<pallas_src>
import jax
import jax.numpy as jnp
from jax.experimental import pallas as pl
from jax.experimental.pallas import tpu as pltpu


def _normalize_kernel(mean_ref, inv_std_ref, x_ref, o_ref):
    # x_ref / o_ref: (TN, 1, TH, W) VMEM blocks of a single channel.
    # mean_ref / inv_std_ref: (C,) f32 in SMEM (scalar prefetch).
    c = pl.program_id(1)
    m = mean_ref[c]        # one scalar load per grid step
    s = inv_std_ref[c]
    o_ref[...] = ((x_ref[...] - m) * s).astype(o_ref.dtype)


def _target_block_bytes():
    """Per-block byte target, mildly generation-aware but safe everywhere."""
    try:
        vmem = pltpu.get_tpu_info().vmem_capacity_bytes
    except Exception:  # pragma: no cover - info query unavailable
        vmem = 64 * 1024 * 1024
    # ~6 MiB blocks sit on the roofline plateau for v5e/v6e/v7x while the
    # double-buffered footprint (~28 MiB) still fits v7x's 64 MiB with headroom.
    return 6 * 1024 * 1024 if vmem >= 64 * 1024 * 1024 else 4 * 1024 * 1024


def _choose_tiles(N, C, H, W, itemsize, target_bytes):
    """Pick (TN, TH) for blocks of shape (TN, 1, TH, W).

    The last block dim is always the full W extent (legal for any W, keeps the
    native (8,128) layout, all-but-edge stores stay unmasked).  TH is a multiple
    of the dtype's native sublane tile or the full H extent.
    """
    sub = 8 * max(1, 4 // itemsize)      # 8 (f32), 16 (bf16), 32 (int8/fp8)
    row_bytes = W * itemsize
    hw_bytes = H * row_bytes
    if hw_bytes <= target_bytes:
        TH = H
        TN = max(1, min(N, target_bytes // hw_bytes))
    else:
        TN = 1
        th = max(sub, (target_bytes // row_bytes) // sub * sub)
        TH = H if (th >= H or H <= sub) else th
    # v7x megacore: make sure a non-trivial tensor yields >= 2 grid blocks so
    # both TensorCores participate (C >= 2 already provides this).
    if (C == 1 and TN >= N and TH >= H
            and N * C * H * W * itemsize > 2 * 1024 * 1024):
        if N > 1:
            TN = (N + 1) // 2
        elif H > sub:
            TH = max(sub, (((H + 1) // 2) // sub) * sub)
    return TN, TH


def transform_layer(x, mean, std):
    """Pallas equivalent of TransformLayer.forward for NCHW input x."""
    N, C, H, W = x.shape
    itemsize = x.dtype.itemsize

    mean_v = jnp.asarray(mean, jnp.float32).reshape(-1)
    inv_std_v = (1.0 / jnp.asarray(std, jnp.float32)).reshape(-1)
    assert mean_v.shape == (C,) and inv_std_v.shape == (C,)

    TN, TH = _choose_tiles(N, C, H, W, itemsize, _target_block_bytes())
    grid = (pl.cdiv(N, TN), C, pl.cdiv(H, TH))

    block_bytes = TN * TH * W * itemsize
    # x block + out block, each double-buffered, plus margin for Mosaic scratch;
    # never below the default scoped limit, capped well under v7x's 64 MiB.
    vmem_limit = min(max(4 * block_bytes + 4 * 1024 * 1024, 16 * 1024 * 1024),
                     48 * 1024 * 1024)

    block = (TN, 1, TH, W)
    idx = lambda n, c, h, *_: (n, c, h, 0)  # *_ absorbs scalar-prefetch refs

    out = pl.pallas_call(
        _normalize_kernel,
        out_shape=jax.ShapeDtypeStruct((N, C, H, W), x.dtype),
        grid_spec=pltpu.PrefetchScalarGridSpec(
            num_scalar_prefetch=2,                  # mean, 1/std -> SMEM
            grid=grid,
            in_specs=[pl.BlockSpec(block, idx)],    # x
            out_specs=pl.BlockSpec(block, idx),
        ),
        compiler_params=pltpu.CompilerParams(
            dimension_semantics=("parallel", "parallel", "parallel"),
            vmem_limit_bytes=int(vmem_limit),
        ),
        # TODO(synk): if the caller can donate x, add input_output_aliases={2: 0}
        # to normalize in place and halve the HBM footprint.
    )(mean_v, inv_std_v, x)

    return out


if __name__ == "__main__":
    key = jax.random.PRNGKey(0)
    N, C, H, W = 2, 4, 16, 16
    x = jax.random.normal(key, (N, C, H, W), dtype=jnp.float32)

    # deterministic "parameters" (module __init__ takes mean/std of length C)
    mean = jnp.array([0.485, 0.456, 0.406, 0.5], dtype=jnp.float32)
    std = jnp.array([0.229, 0.224, 0.225, 0.25], dtype=jnp.float32)

    out = transform_layer(x, mean, std)
    out = jax.block_until_ready(out)

    # reference check in plain JAX (kernel uses x * (1/std); allow a few ULPs)
    ref = (x - mean[None, :, None, None]) / std[None, :, None, None]
    assert out.shape == (N, C, H, W)
    assert jnp.allclose(out, ref, atol=1e-5, rtol=1e-5)

    print("KERNEL_OK")
</pallas_src>

<mosaic_0001>
module attributes {stable_mosaic.version = 11 : i64} {
  func.func @_normalize_kernel(%arg0: i32, %arg1: i32, %arg2: i32, %arg3: memref<4xf32, #tpu.memory_space<smem>>, %arg4: memref<4xf32, #tpu.memory_space<smem>>, %arg5: memref<2x1x16x16xf32, #tpu.memory_space<vmem>>, %arg6: memref<2x1x16x16xf32, #tpu.memory_space<vmem>>) attributes {dimension_semantics = [#tpu.dimension_semantics<parallel>, #tpu.dimension_semantics<parallel>, #tpu.dimension_semantics<parallel>], iteration_bounds = array<i64: 1, 4, 1>, scalar_prefetch = 2 : i64, scratch_operands = 0 : i64, tpu.core_type = #tpu.core_type<tc>, window_params = [{transform_indices = @transform_0, window_bounds = array<i64: 2, 1, 16, 16>}, {transform_indices = @transform_1, window_bounds = array<i64: 2, 1, 16, 16>}]} {
    %0 = arith.index_cast %arg1 : i32 to index
    %1 = memref.load %arg3[%0] : memref<4xf32, #tpu.memory_space<smem>>
    %2 = arith.index_cast %arg1 : i32 to index
    %3 = memref.load %arg4[%2] : memref<4xf32, #tpu.memory_space<smem>>
    %c0 = arith.constant 0 : index
    %c0_0 = arith.constant 0 : index
    %c0_1 = arith.constant 0 : index
    %c0_2 = arith.constant 0 : index
    %4 = vector.load %arg5[%c0, %c0_0, %c0_1, %c0_2] : memref<2x1x16x16xf32, #tpu.memory_space<vmem>>, vector<2x1x16x16xf32>
    %5 = vector.broadcast %1 : f32 to vector<2x1x16x16xf32>
    %6 = arith.subf %4, %5 : vector<2x1x16x16xf32>
    %7 = vector.broadcast %3 : f32 to vector<2x1x16x16xf32>
    %8 = arith.mulf %6, %7 : vector<2x1x16x16xf32>
    %c0_3 = arith.constant 0 : index
    %c0_4 = arith.constant 0 : index
    %c0_5 = arith.constant 0 : index
    %c0_6 = arith.constant 0 : index
    %9 = vector.load %arg6[%c0_3, %c0_4, %c0_5, %c0_6] : memref<2x1x16x16xf32, #tpu.memory_space<vmem>>, vector<2x1x16x16xf32>
    tpu.vector_store %arg6[%c0_3, %c0_4, %c0_5, %c0_6], %8 {strides = array<i32>} : memref<2x1x16x16xf32, #tpu.memory_space<vmem>>, vector<2x1x16x16xf32>,
    return
  }
  func.func @transform_0(%arg0: i32, %arg1: i32, %arg2: i32, %arg3: memref<4xf32, #tpu.memory_space<smem>>, %arg4: memref<4xf32, #tpu.memory_space<smem>>) -> (i32, i32, i32, i32) {
    %c0_i32 = arith.constant 0 : i32
    %c0_i32_0 = arith.constant 0 : i32
    return %arg0, %arg1, %arg2, %c0_i32 : i32, i32, i32, i32
  }
  func.func @transform_1(%arg0: i32, %arg1: i32, %arg2: i32, %arg3: memref<4xf32, #tpu.memory_space<smem>>, %arg4: memref<4xf32, #tpu.memory_space<smem>>) -> (i32, i32, i32, i32) {
    %c0_i32 = arith.constant 0 : i32
    %c0_i32_0 = arith.constant 0 : i32
    return %arg0, %arg1, %arg2, %c0_i32 : i32, i32, i32, i32
  }
}

</mosaic_0001>

<llo_original>
// kernel: tpu_custom_call.1
$region0: #{tpu_custom_call.1}
  #allocation0 [shape = 'u32[]', space=smem, size = 0x4, offset = 0x4, fixed_abs, tag = 'smem constant byte address 0x4 - core index']
  #allocation1 [shape = 'u32[144,128]{1,0:T(1,128)}', space=vmem, size = 0x12000, scoped, tag = 'internal scratch']
  #allocation2 [shape = 's32[1]{0}', space=sflag, size = 0x4, scoped, tag = 'scoped memory for tpu_custom_call.1']
  #allocation3 [shape = 'u8[512]{0}', space=smem, size = 0x200, scoped, tag = 'prefetched SMEM operand 0']
  #allocation4 [shape = 'u8[512]{0}', space=smem, size = 0x200, scoped, tag = 'prefetched SMEM operand 1']
  #allocation9 [shape = 's32[]', space=sflag, size = 0x4, offset = 0, fixed_abs, tag = 'sflag constant byte address 0x0 - dummy sync flag']
  #allocation11 [shape = 's32[]', space=sflag, size = 0x4, offset = 0, fixed_abs, tag = 'sflag constant byte address 0x0 - dummy sync flag']
  %s0 = inlined_call_operand.hbm [shape: f32[4], index: 0, kind: input, shape index: {}]
  %s1 = inlined_call_operand.vmem [shape: f32[4], index: 1, kind: input, shape index: {}]
  %s2 = inlined_call_operand.hbm [shape: f32[2,4,16,16], index: 2, kind: input, shape index: {}]
  %s3 = inlined_call_operand.hbm [shape: f32[2,4,16,16], index: 3, kind: output, shape index: {}]
  %s4 = sld [smem:[#allocation0]]
  $region41: #{tpu_custom_call.1} parent=0
    _
  %s6 = ssub.s32 1, %s4
  %s7 = scalar_select 0, %s6, %s4
  %9 = dma.hbm_to_smem %s0, 16, [#allocation3], [#allocation2]
  %s10 = sshll.u32 %s1, 4
  %s11 = int_to_ptr.vmem [resolvable:$true] %s10
  %13 = dma.vmem_to_smem %s11, 16, [#allocation4], [#allocation2]
  %14 = dma.done [#allocation2], 32
  %15 = sfence
  $region1: #{tpu_custom_call.1} parent=0
    #allocation5 [shape = 'u8[32768]{0}', space=vmem, size = 0x8000, scoped, tag = 'input window, operand 2']
    #allocation6 [shape = 's32[2]{0}', space=sflag, size = 0x8, scoped, tag = 'scoped memory for tpu_custom_call.1']
    #allocation7 [shape = 's32[2]{0}', space=sflag, size = 0x8, scoped, tag = 'scoped memory for tpu_custom_call.1']
    #allocation8 [shape = 'u8[32768]{0}', space=vmem, size = 0x8000, scoped, tag = 'output window, operand 0']
    %16 = vsyncpa [#allocation6], 0
    %s17 = scalar_lea.sflag [#allocation6], 1
    %18 = vsyncpa %s17, 0
    %19 = vsyncpa [#allocation7], 0
    %s20 = scalar_lea.sflag [#allocation7], 1
    %21 = vsyncpa %s20, 0
    loop: start=0, step=1, limit=6
    $region2: #{tpu_custom_call.1} parent=1 // loop_pre_header
      _
    $region3: #{tpu_custom_call.1} parent=1 // loop_header
      %s23 = sphi 0, %s27
      %p24 = scmp.ge.s32.totalorder %s23, 6
      %s30 = sphi 0, %s49
      %s31 = sphi 0, %s45
      %s32 = sphi 0, %s41
      %s33 = sphi 0, %s30
      %s34 = sphi 0, %s31
      %s35 = sphi 0, %s32
      %s36 = sphi 0, %s33
      %s37 = sphi 0, %s34
      %s38 = sphi 0, %s35
      %s56 = sphi 0, %s58
      %s59 = sphi 0, %s56
      %s60 = sphi 0, %s59
      %s76 = sphi 0, %s60
      %s86 = sphi 0, %s88
      %s89 = sphi 0, %s86
      %s90 = sphi 0, %s89
      %s106 = sphi 0, %s90
    $region4: #{tpu_custom_call.1} parent=1 // loop_header_branch
      %26 = sbr.rel (%p24) target = $region8
    $region5: #{tpu_custom_call.1} parent=1 // loop_body
      %s28 = ssub.s32 %s23, 1
      %s29 = ssub.s32 %s23, 2
      %s39 = sadd.s32 1, %s32
      %p40 = scmp.ge.s32.totalorder %s39, 1
      %s41 = scalar_select %p40, 0, %s39
      %s42 = sadd.s32 1, %s31
      %s43 = scalar_select %p40, %s42, %s31
      %p44 = scmp.ge.s32.totalorder %s43, 4
      %s45 = scalar_select %p44, 0, %s43
      %s46 = sadd.s32 1, %s30
      %s47 = scalar_select %p44, %s46, %s30
      %p48 = scmp.ge.s32.totalorder %s47, 1
      %s49 = scalar_select %p48, 0, %s47
      %s50 = ssub.s32 %s30, %s49
      %s51 = ssub.s32 %s31, %s45
      %s52 = sor.u32 %s50, %s51
      %s53 = ssub.s32 %s32, %s41
      %s54 = sor.u32 %s52, %s53
      %p55 = scmp.eq.s32.totalorder %s54, 0
      %s57 = sadd.s32 %s56, 1
      %s58 = scalar_select %p55, %s56, %s57
      %p61 = pneg %p55
      %p62 = scmp.eq.s32.totalorder %s23, 3
      %p63 = por %p61, %p62
      %p64 = scmp.ne.s32.totalorder %s56, %s59
      %p65 = scmp.eq.s32.totalorder %s23, 0
      %p66 = por %p64, %p65
      %p67 = scmp.ne.s32.totalorder %s56, %s59
      %p68 = scmp.eq.s32.totalorder %s28, 3
      %p69 = por %p67, %p68
      %p70 = scmp.ne.s32.totalorder %s59, %s60
      %p71 = scmp.eq.s32.totalorder %s28, 0
      %p72 = por %p70, %p71
      %p73 = scmp.ne.s32.totalorder %s59, %s60
      %p74 = scmp.eq.s32.totalorder %s29, 3
      %p75 = por %p73, %p74
      %p77 = scmp.ne.s32.totalorder %s60, %s76
      %p78 = scmp.eq.s32.totalorder %s29, 0
      %p79 = por %p77, %p78
      %s80 = ssub.s32 %s30, %s49
      %s81 = ssub.s32 %s31, %s45
      %s82 = sor.u32 %s80, %s81
      %s83 = ssub.s32 %s32, %s41
      %s84 = sor.u32 %s82, %s83
      %p85 = scmp.eq.s32.totalorder %s84, 0
      %s87 = sadd.s32 %s86, 1
      %s88 = scalar_select %p85, %s86, %s87
      %p91 = pneg %p85
      %p92 = scmp.eq.s32.totalorder %s23, 3
      %p93 = por %p91, %p92
      %p94 = scmp.ne.s32.totalorder %s86, %s89
      %p95 = scmp.eq.s32.totalorder %s23, 0
      %p96 = por %p94, %p95
      %p97 = scmp.ne.s32.totalorder %s86, %s89
      %p98 = scmp.eq.s32.totalorder %s28, 3
      %p99 = por %p97, %p98
      %p100 = scmp.ne.s32.totalorder %s89, %s90
      %p101 = scmp.eq.s32.totalorder %s28, 0
      %p102 = por %p100, %p101
      %p103 = scmp.ne.s32.totalorder %s89, %s90
      %p104 = scmp.eq.s32.totalorder %s29, 3
      %p105 = por %p103, %p104
      %p107 = scmp.ne.s32.totalorder %s90, %s106
      %p108 = scmp.eq.s32.totalorder %s29, 0
      %p109 = por %p107, %p108
      %p110 = scmp.le.s32.totalorder 1, %s23
      %p111 = scmp.lt.s32.totalorder %s23, 5
      %p112 = pnand %p110, %p111
      %p113 = pneg %p112
      // Predicated region
      $region9: #{tpu_custom_call.1} parent=5 // pred_check
        _
      $region10: #{tpu_custom_call.1} parent=5 // pred_check_branch
        %115 = sbr.rel (%p112) target = $region12
      $region11: #{tpu_custom_call.1} parent=5 // pred_region
        %s116 = ssub.s32 %s23, 1
      $region12: #{tpu_custom_call.1} parent=5 // pred_fallthru
        _
      %p117 = scmp.lt.s32.totalorder %s23, 4
      // Predicated region
      $region13: #{tpu_custom_call.1} parent=5 // pred_check
        %p118 = pneg %p117
      $region14: #{tpu_custom_call.1} parent=5 // pred_check_branch
        %120 = sbr.rel (%p118) target = $region16
      $region15: #{tpu_custom_call.1} parent=5 // pred_region
        // Predicated region
        $region17: #{tpu_custom_call.1} parent=15 // pred_check
          %p121 = pneg %p66
        $region18: #{tpu_custom_call.1} parent=15 // pred_check_branch
          %123 = sbr.rel (%p121) target = $region20
        $region19: #{tpu_custom_call.1} parent=15 // pred_region
          #allocation10 [shape = 'u32[6]{0}', space=smem, size = 0x18, scoped, tag = 'DMA stride descriptor']
          %s124 = sand.u32 %s56, 1
          %s125 = scalar_lea.sflag [#allocation6], %s124
          %s126 = sand.u32 %s56, 1
          %s127 = smul.addr %s126, 32
          %s128 = scalar_lea.vmem [#allocation5], %s127
          %s129 = smul.u32 2, %s30
          %s130 = smul.u32 2, %s32
          %s132 = ssub.s32 512, 512
          %133 = vsyncadd %s125, %s132
          %s134 = smul.addr %s31, 2
          %s135 = sadd.s32 %s130, %s134
          %s136 = smul.addr %s129, 8
          %s137 = sadd.s32 %s135, %s136
          %s138 = smul.addr %s137, 128
          %s139 = scalar_lea.hbm %s2, %s138
          %s141 = sshll.u32 1, 14
          %s142 = sxor.u32 4294967295, %s141
          %s144 = sld [smem:[#allocation0]]
          %s145 = sadd.s32 2, %s144
          %s147 = sshll.u32 7, 26
          %s148 = sxor.u32 4294967295, %s147
          %s149 = sand.u32 0, %s148
          %s150 = sshll.u32 %s145, 26
          %s151 = sor.u32 %s149, %s150
          %s152 = sshll.u32 %s128, 4
          %s153 = int_to_ptr.vmem [resolvable:$true] %s152
          %159 = sst [smem:[#allocation10]] 1024
          %s160 = scalar_lea.smem [#allocation10], 1
          %161 = sst [smem:[%s160]] 256
          %s162 = scalar_lea.smem [#allocation10], 2
          %163 = sst [smem:[%s162]] 2
          %s164 = scalar_lea.smem [#allocation10], 3
          %165 = sst [smem:[%s164]] 128
          %s166 = scalar_lea.smem [#allocation10], 4
          %167 = sst [smem:[%s166]] 128
          %s168 = scalar_lea.smem [#allocation10], 5
          %169 = sst [smem:[%s168]] 8
          %171 = dma.general %s139, 512, %s153, %s125, [#allocation9], [#allocation10], %s151, 0
        $region20: #{tpu_custom_call.1} parent=15 // pred_fallthru
          _
      $region16: #{tpu_custom_call.1} parent=5 // pred_fallthru
        _
      %p172 = scmp.le.s32.totalorder 1, %s23
      %p173 = scmp.lt.s32.totalorder %s23, 5
      %p174 = pnand %p172, %p173
      %p175 = pneg %p174
      // Predicated region
      $region21: #{tpu_custom_call.1} parent=5 // pred_check
        _
      $region22: #{tpu_custom_call.1} parent=5 // pred_check_branch
        %177 = sbr.rel (%p174) target = $region24
      $region23: #{tpu_custom_call.1} parent=5 // pred_region
        %s178 = ssub.s32 %s23, 1
        %s179 = sand.u32 %s59, 1
        %s180 = scalar_lea.sflag [#allocation6], %s179
        %s181 = sand.u32 %s59, 1
        %s182 = smul.addr %s181, 32
        %s183 = scalar_lea.vmem [#allocation5], %s182
        // Predicated region
        $region25: #{tpu_custom_call.1} parent=23 // pred_check
          %p184 = pneg %p72
        $region26: #{tpu_custom_call.1} parent=23 // pred_check_branch
          %186 = sbr.rel (%p184) target = $region28
        $region27: #{tpu_custom_call.1} parent=23 // pred_region
          %187 = dma.done %s180, 512
        $region28: #{tpu_custom_call.1} parent=23 // pred_fallthru
          _
        %s188 = sand.u32 %s59, 1
        %s189 = scalar_lea.sflag [#allocation6], %s188
        %s190 = sand.u32 %s59, 1
        %s191 = smul.addr %s190, 32
        %s192 = scalar_lea.vmem [#allocation5], %s191
        %p193 = pneg %p72
        %p194 = pneg %p69
        %p195 = pneg %p102
        %p196 = pneg %p99
        %s197 = sand.u32 %s89, 1
        %s198 = scalar_lea.sflag [#allocation7], %s197
        %s199 = sand.u32 %s89, 1
        %s200 = smul.addr %s199, 32
        %s201 = scalar_lea.vmem [#allocation8], %s200
        %s202 = smul.u32 2, %s33
        %s203 = smul.u32 2, %s35
        %s204 = smul.u32 2, %s33
        %s205 = smul.u32 2, %s35
        %s206 = sld [smem:[#allocation3 + %s34]]
        %s207 = sld [smem:[#allocation4 + %s34]]
        %v208 = vld [vmem:[%s183] sm:$0xff]
        %v209 = vld [vmem:[%s183 + $0x8] sm:$0xff]
        %v210 = vld [vmem:[%s183 + $0x10] sm:$0xff]
        %v211 = vld [vmem:[%s183 + $0x18] sm:$0xff]
        %v212 = vstv %s206
        %v213 = vsub.f32 %v208, %v212
        %v214 = vsub.f32 %v209, %v212
        %v215 = vsub.f32 %v210, %v212
        %v216 = vsub.f32 %v211, %v212
        %v217 = vstv %s207
        %v218 = vmul.f32 %v213, %v217
        %v219 = vmul.f32 %v214, %v217
        %v220 = vmul.f32 %v215, %v217
        %v221 = vmul.f32 %v216, %v217
        %vm222 = vcmask 130048
        %223 = vst.msk [vmem:[%s201] sm:$0xff] %vm222, %v218
        %224 = vst.msk [vmem:[%s201 + $0x8] sm:$0xff] %vm222, %v219
        %225 = vst.msk [vmem:[%s201 + $0x10] sm:$0xff] %vm222, %v220
        %226 = vst.msk [vmem:[%s201 + $0x18] sm:$0xff] %vm222, %v221
        %s227 = sand.u32 %s89, 1
        %s228 = scalar_lea.sflag [#allocation7], %s227
        %s229 = sand.u32 %s89, 1
        %s230 = smul.addr %s229, 32
        %s231 = scalar_lea.vmem [#allocation8], %s230
        // Predicated region
        $region29: #{tpu_custom_call.1} parent=23 // pred_check
          %p232 = pneg %p99
        $region30: #{tpu_custom_call.1} parent=23 // pred_check_branch
          %234 = sbr.rel (%p232) target = $region32
        $region31: #{tpu_custom_call.1} parent=23 // pred_region
          #allocation12 [shape = 'u32[6]{0}', space=smem, size = 0x18, scoped, tag = 'DMA stride descriptor']
          %s235 = smul.u32 2, %s33
          %s236 = smul.u32 2, %s35
          %s238 = ssub.s32 512, 512
          %239 = vsyncadd %s228, %s238
          %s240 = smul.addr %s34, 2
          %s241 = sadd.s32 %s236, %s240
          %s242 = smul.addr %s235, 8
          %s243 = sadd.s32 %s241, %s242
          %s244 = smul.addr %s243, 128
          %s245 = scalar_lea.hbm %s3, %s244
          %s247 = sshll.u32 1, 14
          %s248 = sxor.u32 4294967295, %s247
          %s251 = sshll.u32 7, 18
          %s252 = sxor.u32 4294967295, %s251
          %s253 = sand.u32 0, %s252
          %s255 = sor.u32 %s253, 0
          %s257 = sshll.u32 3, 24
          %s258 = sxor.u32 4294967295, %s257
          %s259 = sand.u32 %s255, %s258
          %s261 = sor.u32 %s259, 0
          %s262 = sshll.u32 %s231, 4
          %s263 = int_to_ptr.vmem [resolvable:$true] %s262
          %269 = sst [smem:[#allocation12]] 256
          %s270 = scalar_lea.smem [#allocation12], 1
          %271 = sst [smem:[%s270]] 1024
          %s272 = scalar_lea.smem [#allocation12], 2
          %273 = sst [smem:[%s272]] 2
          %s274 = scalar_lea.smem [#allocation12], 3
          %275 = sst [smem:[%s274]] 128
          %s276 = scalar_lea.smem [#allocation12], 4
          %277 = sst [smem:[%s276]] 128
          %s278 = scalar_lea.smem [#allocation12], 5
          %279 = sst [smem:[%s278]] 8
          %281 = dma.general %s263, 512, %s245, %s228, [#allocation11], [#allocation12], %s261, 0
        $region32: #{tpu_custom_call.1} parent=23 // pred_fallthru
          _
      $region24: #{tpu_custom_call.1} parent=5 // pred_fallthru
        _
      %p282 = scmp.le.s32.totalorder 2, %s23
      // Predicated region
      $region33: #{tpu_custom_call.1} parent=5 // pred_check
        %p283 = pneg %p282
      $region34: #{tpu_custom_call.1} parent=5 // pred_check_branch
        %285 = sbr.rel (%p283) target = $region36
      $region35: #{tpu_custom_call.1} parent=5 // pred_region
        %s286 = ssub.s32 %s23, 2
        // Predicated region
        $region37: #{tpu_custom_call.1} parent=35 // pred_check
          %p287 = pneg %p105
        $region38: #{tpu_custom_call.1} parent=35 // pred_check_branch
          %289 = sbr.rel (%p287) target = $region40
        $region39: #{tpu_custom_call.1} parent=35 // pred_region
          %s290 = sand.u32 %s90, 1
          %s291 = scalar_lea.sflag [#allocation7], %s290
          %s292 = sand.u32 %s90, 1
          %s293 = smul.addr %s292, 32
          %s294 = scalar_lea.vmem [#allocation8], %s293
          %295 = dma.done %s291, 512
        $region40: #{tpu_custom_call.1} parent=35 // pred_fallthru
          _
      $region36: #{tpu_custom_call.1} parent=5 // pred_fallthru
        _
    $region6: #{tpu_custom_call.1} parent=1 // loop_footer
      %s27 = sadd.s32 1, %s23
    $region7: #{tpu_custom_call.1} parent=1 // loop_footer_branch
      %22 = sbr.rel target = $region3
    $region8: #{tpu_custom_call.1} parent=1 // loop_exit
      _
    %296 = vsyncpa [#allocation6], 1
    %s297 = scalar_lea.sflag [#allocation6], 1
    %298 = vsyncpa %s297, 1
    %299 = vsyncpa [#allocation7], 1
    %s300 = scalar_lea.sflag [#allocation7], 1
    %301 = vsyncpa %s300, 1

</llo_original>
